<compile_context>
chip_gen: v5e
topology: v5e:2x2
jax: 0.10.0
libtpu: 0.0.40
codegen_flags: <defaults>
</compile_context>

<pallas_src>
import math
import functools

import jax
import jax.numpy as jnp
from jax.experimental import pallas as pl
from jax.experimental.pallas import tpu as pltpu


# ----------------------------------------------------------------------------
# Buffer setup: sinusoidal positional-encoding table (deterministic, plain JAX).
# ----------------------------------------------------------------------------
def make_pos_embedding(emb_size: int, maxlen: int = 500, dtype=jnp.float32) -> jnp.ndarray:
    den = jnp.exp(
        -jnp.arange(0, emb_size, 2, dtype=jnp.float32) * (math.log(10000.0) / emb_size)
    )
    pos = jnp.arange(0, maxlen, dtype=jnp.float32).reshape(maxlen, 1)
    pe = jnp.zeros((maxlen, emb_size), dtype=jnp.float32)
    pe = pe.at[:, 0::2].set(jnp.sin(pos * den))
    pe = pe.at[:, 1::2].set(jnp.cos(pos * den))
    return pe[:, None, :].astype(dtype)  # (maxlen, 1, emb_size)


# ----------------------------------------------------------------------------
# Kernels.
# ----------------------------------------------------------------------------
def _pe_add_kernel(pos_ref, tok_ref, out_ref):
    # tok: (ts, B, E), pos: (ts, 1, E) -> broadcast over batch.  Compute stays in
    # the input dtype (bf16 stays bf16 on v6e/v7x; f32 stays f32).
    out_ref[...] = tok_ref[...] + pos_ref[...]


def _pe_add_dropout_kernel(pos_ref, tok_ref, bits_ref, out_ref, *, threshold: int, scale: float):
    y = tok_ref[...] + pos_ref[...]
    # bits are non-negative int32 values uniform in [0, 2^31); keep with prob 1-p.
    keep = bits_ref[...] >= jnp.int32(threshold)
    out_ref[...] = jnp.where(keep, y * jnp.asarray(scale, dtype=y.dtype), jnp.zeros_like(y))


# ----------------------------------------------------------------------------
# Wrapper.
# ----------------------------------------------------------------------------
def _pick_seq_tile(S: int, B: int, E: int, itemsize: int,
                   target_bytes: int = 2 * 1024 * 1024) -> int:
    """Largest seq-tile that divides S with a token block of <= ~target_bytes.

    A few MiB per block keeps (in x2 double-buffers + bits x2 + out x2 + pos)
    well under the 32 MiB default scoped-VMEM budget on every generation
    (including v7x's 64 MiB physical VMEM), while being big enough to amortize
    the ~0.35 us per-grid-step overhead.
    """
    ts_max = max(1, target_bytes // max(1, B * E * itemsize))
    if ts_max >= S:
        return S
    for ts in range(min(ts_max, S), 0, -1):
        if S % ts == 0:
            return ts
    return 1


def positional_encoding_forward(
    token_embedding: jnp.ndarray,   # (S, B, E)
    pos_embedding: jnp.ndarray,     # (maxlen, 1, E)
    *,
    dropout_p: float,
    rng_key=None,
    deterministic: bool = True,
):
    S, B, E = token_embedding.shape
    dtype = token_embedding.dtype
    itemsize = jnp.dtype(dtype).itemsize

    # Slice buffer to the sequence length and match the compute dtype.
    pos = jax.lax.slice_in_dim(pos_embedding, 0, S, axis=0).astype(dtype)  # (S, 1, E)

    ts = _pick_seq_tile(S, B, E, itemsize)
    grid = (S // ts,)

    pos_spec = pl.BlockSpec((ts, 1, E), lambda i: (i, 0, 0))
    tok_spec = pl.BlockSpec((ts, B, E), lambda i: (i, 0, 0))
    out_spec = pl.BlockSpec((ts, B, E), lambda i: (i, 0, 0))
    out_shape = jax.ShapeDtypeStruct((S, B, E), dtype)
    # Every sequence tile is independent -> parallel (sharded across v7x's 2 TCs).
    compiler_params = pltpu.CompilerParams(dimension_semantics=("parallel",))

    p = 0.0 if deterministic else float(dropout_p)

    if p <= 0.0:
        # Hot inference path: pure streaming add, no seed / mask plumbing.
        cost = pl.CostEstimate(
            flops=S * B * E,
            transcendentals=0,
            bytes_accessed=(2 * S * B * E + S * E) * itemsize,
        )
        return pl.pallas_call(
            _pe_add_kernel,
            out_shape=out_shape,
            grid=grid,
            in_specs=[pos_spec, tok_spec],
            out_specs=out_spec,
            compiler_params=compiler_params,
            cost_estimate=cost,
        )(pos, token_embedding)

    # Training path: inverted dropout.  Random bits are generated host-side
    # (portable across TPU and interpret mode) and compared against an integer
    # threshold inside the kernel -- no float convert / float compare.
    if rng_key is None:
        rng_key = jax.random.PRNGKey(0)
    rbits = jax.random.bits(rng_key, (S, B, E), dtype=jnp.uint32)
    rbits = (rbits >> 1).astype(jnp.int32)          # uniform in [0, 2^31)
    threshold = int(round(p * float(2 ** 31)))      # keep iff bits >= threshold
    scale = 1.0 / (1.0 - p)

    bits_spec = pl.BlockSpec((ts, B, E), lambda i: (i, 0, 0))
    cost = pl.CostEstimate(
        flops=3 * S * B * E,
        transcendentals=0,
        bytes_accessed=(2 * S * B * E + S * E) * itemsize + 4 * S * B * E,
    )
    kernel = functools.partial(_pe_add_dropout_kernel, threshold=threshold, scale=scale)
    return pl.pallas_call(
        kernel,
        out_shape=out_shape,
        grid=grid,
        in_specs=[pos_spec, tok_spec, bits_spec],
        out_specs=out_spec,
        compiler_params=compiler_params,
        cost_estimate=cost,
    )(pos, token_embedding, rbits)


if __name__ == "__main__":
    # Small shapes consistent with the module's forward: (seq, batch, emb).
    S, B, E = 8, 2, 32
    DROPOUT = 0.1
    MAXLEN = 500

    key = jax.random.PRNGKey(0)
    k_tok, k_drop = jax.random.split(key)
    token_embedding = jax.random.normal(k_tok, (S, B, E), dtype=jnp.float32)

    pos_embedding = make_pos_embedding(E, MAXLEN, dtype=jnp.float32)  # (500, 1, 32)
    ref = token_embedding + pos_embedding[:S]

    # Eval-mode (dropout disabled): exactly x + pos_embedding[:S].
    out_eval = positional_encoding_forward(
        token_embedding, pos_embedding, dropout_p=DROPOUT, deterministic=True
    )
    out_eval = jax.block_until_ready(out_eval)
    assert out_eval.shape == (S, B, E)
    assert jnp.allclose(out_eval, ref, atol=1e-6, rtol=1e-6), "mismatch vs reference add"

    # Training-mode: inverted dropout -> each element is 0 or ref / (1 - p).
    out_train = positional_encoding_forward(
        token_embedding, pos_embedding, dropout_p=DROPOUT,
        deterministic=False, rng_key=k_drop,
    )
    out_train = jax.block_until_ready(out_train)
    assert out_train.shape == (S, B, E)
    scale = 1.0 / (1.0 - DROPOUT)
    dropped = out_train == 0.0
    kept_ok = jnp.isclose(out_train, ref * scale, atol=1e-5, rtol=1e-5)
    assert bool(jnp.all(dropped | kept_ok)), "dropout output not {0, x/(1-p)}"

    print("KERNEL_OK")
</pallas_src>

<mosaic_0001>
module attributes {stable_mosaic.version = 11 : i64} {
  func.func @_pe_add_kernel(%arg0: i32, %arg1: memref<8x1x32xf32, #tpu.memory_space<vmem>>, %arg2: memref<8x2x32xf32, #tpu.memory_space<vmem>>, %arg3: memref<8x2x32xf32, #tpu.memory_space<vmem>>) attributes {dimension_semantics = [#tpu.dimension_semantics<parallel>], iteration_bounds = array<i64: 1>, scalar_prefetch = 0 : i64, scratch_operands = 0 : i64, tpu.core_type = #tpu.core_type<tc>, window_params = [{transform_indices = @transform_0, window_bounds = array<i64: 8, 1, 32>}, {transform_indices = @transform_1, window_bounds = array<i64: 8, 2, 32>}, {transform_indices = @transform_2, window_bounds = array<i64: 8, 2, 32>}]} {
    %c0 = arith.constant 0 : index
    %c0_0 = arith.constant 0 : index
    %c0_1 = arith.constant 0 : index
    %0 = vector.load %arg2[%c0, %c0_0, %c0_1] : memref<8x2x32xf32, #tpu.memory_space<vmem>>, vector<8x2x32xf32>
    %c0_2 = arith.constant 0 : index
    %c0_3 = arith.constant 0 : index
    %c0_4 = arith.constant 0 : index
    %1 = vector.load %arg1[%c0_2, %c0_3, %c0_4] : memref<8x1x32xf32, #tpu.memory_space<vmem>>, vector<8x1x32xf32>
    %2 = vector.broadcast %1 : vector<8x1x32xf32> to vector<8x2x32xf32>
    %3 = arith.addf %0, %2 : vector<8x2x32xf32>
    %c0_5 = arith.constant 0 : index
    %c0_6 = arith.constant 0 : index
    %c0_7 = arith.constant 0 : index
    %4 = vector.load %arg3[%c0_5, %c0_6, %c0_7] : memref<8x2x32xf32, #tpu.memory_space<vmem>>, vector<8x2x32xf32>
    tpu.vector_store %arg3[%c0_5, %c0_6, %c0_7], %3 {strides = array<i32>} : memref<8x2x32xf32, #tpu.memory_space<vmem>>, vector<8x2x32xf32>,
    return
  }
  func.func @transform_0(%arg0: i32) -> (i32, i32, i32) {
    %c0_i32 = arith.constant 0 : i32
    %c0_i32_0 = arith.constant 0 : i32
    %c0_i32_1 = arith.constant 0 : i32
    return %arg0, %c0_i32, %c0_i32_0 : i32, i32, i32
  }
  func.func @transform_1(%arg0: i32) -> (i32, i32, i32) {
    %c0_i32 = arith.constant 0 : i32
    %c0_i32_0 = arith.constant 0 : i32
    %c0_i32_1 = arith.constant 0 : i32
    return %arg0, %c0_i32, %c0_i32_0 : i32, i32, i32
  }
  func.func @transform_2(%arg0: i32) -> (i32, i32, i32) {
    %c0_i32 = arith.constant 0 : i32
    %c0_i32_0 = arith.constant 0 : i32
    %c0_i32_1 = arith.constant 0 : i32
    return %arg0, %c0_i32, %c0_i32_0 : i32, i32, i32
  }
}

</mosaic_0001>

<llo_original>
// kernel: tpu_custom_call.1
$region0: #{tpu_custom_call.1}
  #allocation0 [shape = 'u32[]', space=smem, size = 0x4, offset = 0x4, fixed_abs, tag = 'smem constant byte address 0x4 - core index']
  #allocation1 [shape = 'u32[72,128]{1,0:T(1,128)}', space=vmem, size = 0x9000, scoped, tag = 'internal scratch']
  %s0 = inlined_call_operand.hbm [shape: f32[8,1,32], index: 0, kind: input, shape index: {}]
  %s1 = inlined_call_operand.hbm [shape: f32[8,2,32], index: 1, kind: input, shape index: {}]
  %s2 = inlined_call_operand.hbm [shape: f32[8,2,32], index: 2, kind: output, shape index: {}]
  %s3 = sld [smem:[#allocation0]]
  $region26: #{tpu_custom_call.1} parent=0
    _
  %s5 = ssub.s32 1, %s3
  %s6 = scalar_select 0, %s5, %s3
  $region1: #{tpu_custom_call.1} parent=0
    #allocation2 [shape = 'u8[4096]{0}', space=vmem, size = 0x1000, scoped, tag = 'input window, operand 0, single buffered']
    #allocation3 [shape = 's32[1]{0}', space=sflag, size = 0x4, scoped, tag = 'scoped memory for tpu_custom_call.1']
    #allocation4 [shape = 's32[1]{0}', space=sflag, size = 0x4, scoped, tag = 'scoped memory for tpu_custom_call.1']
    #allocation5 [shape = 'u8[8192]{0}', space=vmem, size = 0x2000, scoped, tag = 'input window, operand 1, single buffered']
    #allocation6 [shape = 's32[1]{0}', space=sflag, size = 0x4, scoped, tag = 'scoped memory for tpu_custom_call.1']
    #allocation7 [shape = 'u8[8192]{0}', space=vmem, size = 0x2000, scoped, tag = 'output window, operand 0, single buffered']
    %7 = vsyncpa [#allocation3], 0
    %8 = vsyncpa [#allocation6], 0
    %9 = vsyncpa [#allocation4], 0
    // Predicated region
    $region2: #{tpu_custom_call.1} parent=1 // pred_check
      _
    $region3: #{tpu_custom_call.1} parent=1 // pred_check_branch
      %11 = sbr.rel (0) target = $region5
    $region4: #{tpu_custom_call.1} parent=1 // pred_region
      %13 = vsyncadd [#allocation3], 0
      %s14 = sshll.u32 %s0, 4
      %s15 = int_to_ptr.hbm [resolvable:$true] %s14
      %s16 = sshll.u32 [#allocation2], 4
      %s17 = int_to_ptr.vmem [resolvable:$true] %s16
      %22 = dma.hbm_to_vmem [thread:$0]  %s15, 128, %s17, [#allocation3], 16, 16, 1
    $region5: #{tpu_custom_call.1} parent=1 // pred_fallthru
      _
    // Predicated region
    $region6: #{tpu_custom_call.1} parent=1 // pred_check
      _
    $region7: #{tpu_custom_call.1} parent=1 // pred_check_branch
      %24 = sbr.rel (0) target = $region9
    $region8: #{tpu_custom_call.1} parent=1 // pred_region
      %26 = vsyncadd [#allocation6], 0
      %s27 = sshll.u32 %s1, 4
      %s28 = int_to_ptr.hbm [resolvable:$true] %s27
      %s29 = sshll.u32 [#allocation5], 4
      %s30 = int_to_ptr.vmem [resolvable:$true] %s29
      %35 = dma.hbm_to_vmem [thread:$0]  %s28, 256, %s30, [#allocation6], 32, 32, 2
    $region9: #{tpu_custom_call.1} parent=1 // pred_fallthru
      _
    // Predicated region
    $region10: #{tpu_custom_call.1} parent=1 // pred_check
      _
    $region11: #{tpu_custom_call.1} parent=1 // pred_check_branch
      %37 = sbr.rel (0) target = $region13
    $region12: #{tpu_custom_call.1} parent=1 // pred_region
      %39 = dma.done [#allocation3], 128
    $region13: #{tpu_custom_call.1} parent=1 // pred_fallthru
      _
    // Predicated region
    $region14: #{tpu_custom_call.1} parent=1 // pred_check
      _
    $region15: #{tpu_custom_call.1} parent=1 // pred_check_branch
      %41 = sbr.rel (0) target = $region17
    $region16: #{tpu_custom_call.1} parent=1 // pred_region
      %43 = dma.done [#allocation6], 256
    $region17: #{tpu_custom_call.1} parent=1 // pred_fallthru
      _
    %v44 = vld [vmem:[#allocation5] sm:$0x3]
    %v45 = vld [vmem:[#allocation5 + $0x2] sm:$0x3]
    %v46 = vld [vmem:[#allocation5 + $0x4] sm:$0x3]
    %v47 = vld [vmem:[#allocation5 + $0x6] sm:$0x3]
    %v48 = vld [vmem:[#allocation5 + $0x8] sm:$0x3]
    %v49 = vld [vmem:[#allocation5 + $0xa] sm:$0x3]
    %v50 = vld [vmem:[#allocation5 + $0xc] sm:$0x3]
    %v51 = vld [vmem:[#allocation5 + $0xe] sm:$0x3]
    %v52 = vld [vmem:[#allocation2] sm:$0x1]
    %v53 = vld [vmem:[#allocation2 + $0x1] sm:$0x1]
    %v54 = vld [vmem:[#allocation2 + $0x2] sm:$0x1]
    %v55 = vld [vmem:[#allocation2 + $0x3] sm:$0x1]
    %v56 = vld [vmem:[#allocation2 + $0x4] sm:$0x1]
    %v57 = vld [vmem:[#allocation2 + $0x5] sm:$0x1]
    %v58 = vld [vmem:[#allocation2 + $0x6] sm:$0x1]
    %v59 = vld [vmem:[#allocation2 + $0x7] sm:$0x1]
    %v68 = vperm.slane %v52, 0
    %v69 = vperm.slane %v53, 0
    %v70 = vperm.slane %v54, 0
    %v71 = vperm.slane %v55, 0
    %v72 = vperm.slane %v56, 0
    %v73 = vperm.slane %v57, 0
    %v74 = vperm.slane %v58, 0
    %v75 = vperm.slane %v59, 0
    %v84 = vadd.f32 %v44, %v68
    %v85 = vadd.f32 %v45, %v69
    %v86 = vadd.f32 %v46, %v70
    %v87 = vadd.f32 %v47, %v71
    %v88 = vadd.f32 %v48, %v72
    %v89 = vadd.f32 %v49, %v73
    %v90 = vadd.f32 %v50, %v74
    %v91 = vadd.f32 %v51, %v75
    %vm92 = vcmask 254976
    %93 = vst.msk [vmem:[#allocation7] sm:$0x3] %vm92, %v84
    %94 = vst.msk [vmem:[#allocation7 + $0x2] sm:$0x3] %vm92, %v85
    %95 = vst.msk [vmem:[#allocation7 + $0x4] sm:$0x3] %vm92, %v86
    %96 = vst.msk [vmem:[#allocation7 + $0x6] sm:$0x3] %vm92, %v87
    %97 = vst.msk [vmem:[#allocation7 + $0x8] sm:$0x3] %vm92, %v88
    %98 = vst.msk [vmem:[#allocation7 + $0xa] sm:$0x3] %vm92, %v89
    %99 = vst.msk [vmem:[#allocation7 + $0xc] sm:$0x3] %vm92, %v90
    %100 = vst.msk [vmem:[#allocation7 + $0xe] sm:$0x3] %vm92, %v91
    // Predicated region
    $region18: #{tpu_custom_call.1} parent=1 // pred_check
      _
    $region19: #{tpu_custom_call.1} parent=1 // pred_check_branch
      %102 = sbr.rel (0) target = $region21
    $region20: #{tpu_custom_call.1} parent=1 // pred_region
      %104 = vsyncadd [#allocation4], 0
      %s105 = sshll.u32 [#allocation7], 4
      %s106 = int_to_ptr.vmem [resolvable:$true] %s105
      %s107 = sshll.u32 %s2, 4
      %s108 = int_to_ptr.hbm [resolvable:$true] %s107
      %113 = dma.vmem_to_hbm [thread:$0]  %s106, 256, %s108, [#allocation4], 32, 32, 2
    $region21: #{tpu_custom_call.1} parent=1 // pred_fallthru
      _
    // Predicated region
    $region22: #{tpu_custom_call.1} parent=1 // pred_check
      _
    $region23: #{tpu_custom_call.1} parent=1 // pred_check_branch
      %115 = sbr.rel (0) target = $region25
    $region24: #{tpu_custom_call.1} parent=1 // pred_region
      %117 = dma.done [#allocation4], 256
    $region25: #{tpu_custom_call.1} parent=1 // pred_fallthru
      _
    %118 = vsyncpa [#allocation3], 1
    %119 = vsyncpa [#allocation6], 1
    %120 = vsyncpa [#allocation4], 1

</llo_original>
